<compile_context>
chip_gen: v6e
topology: v6e:2x2x1
jax: 0.10.0
libtpu: 0.0.40
codegen_flags: <defaults>
</compile_context>

<pallas_src>
import jax
import jax.numpy as jnp
from jax.experimental import pallas as pl
from jax.experimental.pallas import tpu as pltpu

_SUBLANE = 8
_LANE = 128


def _vmem_capacity_bytes():
    """Physical per-TensorCore VMEM (128 MiB v5e/v6e, 64 MiB v7x); conservative fallback."""
    try:
        cap = getattr(pltpu.get_tpu_info(), "vmem_capacity_bytes", None)
        if cap:
            return int(cap)
    except Exception:
        pass
    return 64 * 1024 * 1024  # v7x-sized fallback is safe on every generation


def _tile_plan(B, D, block_rows=None, block_cols=None):
    """Pick (tb, td, vmem_limit_bytes) for a (B, D) input.

    - vmem_limit ~ 80% of physical VMEM (≈102 MiB v5e/v6e, ≈51 MiB v7x).
    - Per-block target ≈ 0.85*vmem_limit / 4 (in + out each double-buffered), capped at
      16 MiB; budgeted in elements at 4 B/elem so f32 intermediates of bf16 blocks can't
      exceed the byte budget either.
    - td == D (full feature width, lane-dense stores) unless even 8 rows of full width
      exceed the budget, in which case the feature axis is tiled too.
    """
    cap = _vmem_capacity_bytes()
    vmem_limit = int(cap * 0.8)
    tile_bytes = min(16 * 1024 * 1024, int(vmem_limit * 0.85) // 4)
    max_elems = max(tile_bytes // 4, _SUBLANE * _LANE)

    if B * D <= max_elems:
        tb, td = B, D                                   # whole array in a single block
    else:
        rows = (max_elems // D) // _SUBLANE * _SUBLANE
        if rows >= _SUBLANE:
            tb, td = min(rows, B), D                    # stream over batch, full width
        else:
            # Very wide rows: tile the feature axis too; logdet accumulates across the
            # innermost ("arbitrary") feature grid axis in the resident output block.
            tb = B if B < _SUBLANE else max(_SUBLANE, min(B, 256) // _SUBLANE * _SUBLANE)
            td = (max_elems // tb) // _LANE * _LANE
            td = max(_LANE, min(td, D))

    if block_rows is not None:
        tb = min(int(block_rows), B)
    if block_cols is not None:
        td = min(int(block_cols), D)
    return tb, td, vmem_limit


def _make_kernel(mode, td, d_total, mask_cols):
    """Kernel over a (tb, td) block; grid = (batch blocks, feature blocks)."""

    def kernel(x_ref, y_ref, logdet_ref):
        j = pl.program_id(1)
        x = x_ref[...].astype(jnp.float32)

        if mode == "direct":
            ax = jnp.abs(x)
            t = jnp.exp(-ax)                              # EUP; t in (0, 1], no overflow
            s = jnp.where(x >= 0, 1.0, t) / (1.0 + t)     # stable sigmoid, exact divide
            y_ref[...] = s.astype(y_ref.dtype)
            # log(s*(1-s)) = -|x| - 2*log(1 + exp(-|x|)); symmetric in x, never -inf.
            log_jac = -ax - 2.0 * jnp.log(1.0 + t)
        else:
            # Like the PyTorch module, inputs outside (0, 1) give nan/-inf.
            log_x = jnp.log(x)
            log_1mx = jnp.log(1.0 - x)
            y_ref[...] = (log_x - log_1mx).astype(y_ref.dtype)   # log(x / (1 - x))
            log_jac = -(log_x + log_1mx)                          # -log(x - x^2)

        if mask_cols:
            # Ragged last feature block: zero out padding columns before the reduce.
            col = jax.lax.broadcasted_iota(jnp.int32, log_jac.shape, 1) + j * td
            log_jac = jnp.where(col < d_total, log_jac, 0.0)

        partial = jnp.sum(log_jac, axis=-1, keepdims=True)        # (tb, 1) f32

        # logdet block index is constant across j -> resident accumulator (P3 pattern).
        @pl.when(j == 0)
        def _():
            logdet_ref[...] = jnp.zeros_like(logdet_ref)

        logdet_ref[...] += partial

    return kernel


def sigmoid_flow(inputs, cond_inputs=None, mode="direct", block_rows=None, block_cols=None):
    """Pallas equivalent of Sigmoid.forward. inputs: (B, D) float array.

    Returns (y, logdet) with y in inputs.dtype and logdet in float32, shape (B, 1).
    """
    del cond_inputs  # unused, matches the PyTorch module
    B, D = inputs.shape
    itemsize = jnp.dtype(inputs.dtype).itemsize

    tb, td, vmem_limit = _tile_plan(B, D, block_rows=block_rows, block_cols=block_cols)
    mask_cols = (td < D) and (D % td != 0)
    kernel = _make_kernel(mode, td, D, mask_cols)
    grid = (pl.cdiv(B, tb), pl.cdiv(D, td))

    n_trans = 3 if mode == "direct" else 2  # direct: exp, log, recip; inverse: 2x log
    cost = pl.CostEstimate(
        flops=6 * B * D,
        transcendentals=n_trans * B * D,
        bytes_accessed=2 * B * D * itemsize + B * 4,
    )

    y, logdet = pl.pallas_call(
        kernel,
        out_shape=(
            jax.ShapeDtypeStruct((B, D), inputs.dtype),
            jax.ShapeDtypeStruct((B, 1), jnp.float32),
        ),
        grid_spec=pltpu.PrefetchScalarGridSpec(
            num_scalar_prefetch=0,
            grid=grid,
            in_specs=[pl.BlockSpec((tb, td), lambda i, j: (i, j))],
            out_specs=[
                pl.BlockSpec((tb, td), lambda i, j: (i, j)),
                pl.BlockSpec((tb, 1), lambda i, j: (i, 0)),
            ],
        ),
        compiler_params=pltpu.CompilerParams(
            # Batch tiles are independent -> shard across TensorCores on v7x megacore;
            # the feature axis (when tiled) carries the logdet accumulation.
            dimension_semantics=("parallel", "arbitrary"),
            vmem_limit_bytes=vmem_limit,
        ),
        cost_estimate=cost,
    )(inputs)
    return y, logdet


if __name__ == "__main__":
    key = jax.random.PRNGKey(0)
    k1, k2, k3, k4 = jax.random.split(key, 4)

    # --- small shape consistent with the module's 2-D (batch, features) input ---
    B, D = 16, 32
    x = jax.random.normal(k1, (B, D), dtype=jnp.float32)

    # direct mode (default in the PyTorch module)
    y, logdet = sigmoid_flow(x, mode="direct")
    jax.block_until_ready((y, logdet))
    s_ref = jax.nn.sigmoid(x)
    logdet_ref = jnp.sum(jnp.log(s_ref * (1.0 - s_ref)), axis=-1, keepdims=True)
    assert jnp.allclose(y, s_ref, atol=1e-4, rtol=1e-5), "direct y mismatch"
    assert jnp.allclose(logdet, logdet_ref, atol=1e-2, rtol=1e-4), "direct logdet mismatch"

    # inverse mode, checked on in-domain inputs
    u = jax.random.uniform(k2, (B, D), dtype=jnp.float32, minval=0.05, maxval=0.95)
    xi, logdet_i = sigmoid_flow(u, mode="inverse")
    jax.block_until_ready((xi, logdet_i))
    xi_ref = jnp.log(u / (1.0 - u))
    logdet_i_ref = -jnp.sum(jnp.log(u - u * u), axis=-1, keepdims=True)
    assert jnp.allclose(xi, xi_ref, atol=1e-4, rtol=1e-5), "inverse y mismatch"
    assert jnp.allclose(logdet_i, logdet_i_ref, atol=1e-2, rtol=1e-4), "inverse logdet mismatch"

    # --- default auto-tiling path on a moderate shape (single lane-dense block) ---
    xm = jax.random.normal(k3, (256, 512), dtype=jnp.float32)
    ym, ldm = sigmoid_flow(xm, mode="direct")
    jax.block_until_ready((ym, ldm))
    sm = jax.nn.sigmoid(xm)
    ldm_ref = jnp.sum(jnp.log(sm * (1.0 - sm)), axis=-1, keepdims=True)
    assert jnp.allclose(ym, sm, atol=1e-4, rtol=1e-5), "auto-tiled y mismatch"
    assert jnp.allclose(ldm, ldm_ref, atol=1e-2, rtol=1e-4), "auto-tiled logdet mismatch"

    # --- multi-grid-step batch streaming path ---
    xb = jax.random.normal(k4, (512, 256), dtype=jnp.float32)
    yb, ldb = sigmoid_flow(xb, mode="direct", block_rows=128)
    jax.block_until_ready((yb, ldb))
    sb = jax.nn.sigmoid(xb)
    ldb_ref = jnp.sum(jnp.log(sb * (1.0 - sb)), axis=-1, keepdims=True)
    assert jnp.allclose(yb, sb, atol=1e-4, rtol=1e-5), "batch-tiled y mismatch"
    assert jnp.allclose(ldb, ldb_ref, atol=1e-2, rtol=1e-4), "batch-tiled logdet mismatch"

    # --- feature-tiled fallback path; ragged last feature block exercises the mask ---
    xw = jax.random.normal(k1, (64, 384), dtype=jnp.float32)
    yw, ldw = sigmoid_flow(xw, mode="direct", block_rows=32, block_cols=256)
    jax.block_until_ready((yw, ldw))
    sw = jax.nn.sigmoid(xw)
    ldw_ref = jnp.sum(jnp.log(sw * (1.0 - sw)), axis=-1, keepdims=True)
    assert jnp.allclose(yw, sw, atol=1e-4, rtol=1e-5), "feature-tiled y mismatch"
    assert jnp.allclose(ldw, ldw_ref, atol=1e-2, rtol=1e-4), "feature-tiled logdet mismatch"

    print("KERNEL_OK")
</pallas_src>

<mosaic_0001>
module attributes {stable_mosaic.version = 11 : i64} {
  func.func @kernel(%arg0: i32, %arg1: i32, %arg2: memref<16x32xf32, #tpu.memory_space<vmem>>, %arg3: memref<16x32xf32, #tpu.memory_space<vmem>>, %arg4: memref<16x1xf32, #tpu.memory_space<vmem>>) attributes {dimension_semantics = [#tpu.dimension_semantics<parallel>, #tpu.dimension_semantics<arbitrary>], iteration_bounds = array<i64: 1, 1>, scalar_prefetch = 0 : i64, scratch_operands = 0 : i64, tpu.core_type = #tpu.core_type<tc>, window_params = [{transform_indices = @transform_0, window_bounds = array<i64: 16, 32>}, {transform_indices = @transform_1, window_bounds = array<i64: 16, 32>}, {transform_indices = @transform_2, window_bounds = array<i64: 16, 1>}]} {
    %c0 = arith.constant 0 : index
    %c0_0 = arith.constant 0 : index
    %0 = vector.load %arg2[%c0, %c0_0] : memref<16x32xf32, #tpu.memory_space<vmem>>, vector<16x32xf32>
    %1 = math.absf %0 : vector<16x32xf32>
    %cst = arith.constant 0.000000e+00 : f32
    %2 = vector.broadcast %cst : f32 to vector<16x32xf32>
    %3 = arith.subf %2, %1 : vector<16x32xf32>
    %4 = math.exp %3 : vector<16x32xf32>
    %cst_1 = arith.constant 0.000000e+00 : f32
    %5 = vector.broadcast %cst_1 : f32 to vector<16x32xf32>
    %6 = arith.cmpf oge, %0, %5 : vector<16x32xf32>
    %cst_2 = arith.constant 1.000000e+00 : f32
    %7 = vector.broadcast %cst_2 : f32 to vector<16x32xf32>
    %8 = arith.select %6, %7, %4 : vector<16x32xi1>, vector<16x32xf32>
    %cst_3 = arith.constant 1.000000e+00 : f32
    %9 = vector.broadcast %cst_3 : f32 to vector<16x32xf32>
    %10 = arith.addf %9, %4 : vector<16x32xf32>
    %11 = arith.divf %8, %10 : vector<16x32xf32>
    %c0_4 = arith.constant 0 : index
    %c0_5 = arith.constant 0 : index
    %12 = vector.load %arg3[%c0_4, %c0_5] : memref<16x32xf32, #tpu.memory_space<vmem>>, vector<16x32xf32>
    tpu.vector_store %arg3[%c0_4, %c0_5], %11 {strides = array<i32>} : memref<16x32xf32, #tpu.memory_space<vmem>>, vector<16x32xf32>,
    %cst_6 = arith.constant 0.000000e+00 : f32
    %13 = vector.broadcast %cst_6 : f32 to vector<16x32xf32>
    %14 = arith.subf %13, %1 : vector<16x32xf32>
    %cst_7 = arith.constant 1.000000e+00 : f32
    %15 = vector.broadcast %cst_7 : f32 to vector<16x32xf32>
    %16 = arith.addf %15, %4 : vector<16x32xf32>
    %17 = math.log %16 : vector<16x32xf32>
    %cst_8 = arith.constant 2.000000e+00 : f32
    %18 = vector.broadcast %cst_8 : f32 to vector<16x32xf32>
    %19 = arith.mulf %18, %17 : vector<16x32xf32>
    %20 = arith.subf %14, %19 : vector<16x32xf32>
    %cst_9 = arith.constant dense<0.000000e+00> : vector<16xf32>
    %21 = vector.multi_reduction <add>, %20, %cst_9 [1] : vector<16x32xf32> to vector<16xf32>
    %22 = vector.shape_cast %21 : vector<16xf32> to vector<16x1xf32>
    %c0_i32 = arith.constant 0 : i32
    %23 = arith.cmpi eq, %arg1, %c0_i32 : i32
    %24 = arith.extui %23 : i1 to i32
    %c0_i32_10 = arith.constant 0 : i32
    %25 = arith.cmpi ne, %24, %c0_i32_10 : i32
    scf.if %25 {
      %cst_15 = arith.constant 0.000000e+00 : f32
      %29 = vector.broadcast %cst_15 : f32 to vector<16x1xf32>
      %c0_16 = arith.constant 0 : index
      %c0_17 = arith.constant 0 : index
      %30 = vector.load %arg4[%c0_16, %c0_17] : memref<16x1xf32, #tpu.memory_space<vmem>>, vector<16x1xf32>
      tpu.vector_store %arg4[%c0_16, %c0_17], %29 {strides = array<i32>} : memref<16x1xf32, #tpu.memory_space<vmem>>, vector<16x1xf32>,
    } else {
    }
    %c0_11 = arith.constant 0 : index
    %c0_12 = arith.constant 0 : index
    %26 = vector.load %arg4[%c0_11, %c0_12] : memref<16x1xf32, #tpu.memory_space<vmem>>, vector<16x1xf32>
    %27 = arith.addf %26, %22 : vector<16x1xf32>
    %c0_13 = arith.constant 0 : index
    %c0_14 = arith.constant 0 : index
    %28 = vector.load %arg4[%c0_13, %c0_14] : memref<16x1xf32, #tpu.memory_space<vmem>>, vector<16x1xf32>
    tpu.vector_store %arg4[%c0_13, %c0_14], %27 {strides = array<i32>} : memref<16x1xf32, #tpu.memory_space<vmem>>, vector<16x1xf32>,
    return
  }
  func.func @transform_0(%arg0: i32, %arg1: i32) -> (i32, i32) {
    %c0_i32 = arith.constant 0 : i32
    return %arg0, %arg1 : i32, i32
  }
  func.func @transform_1(%arg0: i32, %arg1: i32) -> (i32, i32) {
    %c0_i32 = arith.constant 0 : i32
    return %arg0, %arg1 : i32, i32
  }
  func.func @transform_2(%arg0: i32, %arg1: i32) -> (i32, i32) {
    %c0_i32 = arith.constant 0 : i32
    %c0_i32_0 = arith.constant 0 : i32
    return %arg0, %c0_i32 : i32, i32
  }
}

</mosaic_0001>

<llo_original>
// kernel: tpu_custom_call.1
$region0: #{tpu_custom_call.1}
  #allocation0 [shape = 'u32[]', space=smem, size = 0x4, offset = 0x4, fixed_abs, tag = 'smem constant byte address 0x4 - core index']
  #allocation1 [shape = 'u32[144,128]{1,0:T(1,128)}', space=vmem, size = 0x12000, scoped, tag = 'internal scratch']
  %s0 = inlined_call_operand.hbm [shape: f32[16,32], index: 0, kind: input, shape index: {}]
  %s1 = inlined_call_operand.hbm [shape: f32[16,32], index: 1, kind: output, shape index: {0}]
  %s2 = inlined_call_operand.vmem [shape: f32[16,1], index: 2, kind: output, shape index: {1}]
  %3 = xla_tuple %s1, %s2
  %s4 = sld [smem:[#allocation0]]
  $region30: #{tpu_custom_call.1} parent=0
    _
  %s6 = ssub.s32 1, %s4
  %s7 = scalar_select 0, %s6, %s4
  $region1: #{tpu_custom_call.1} parent=0
    #allocation2 [shape = 'u8[8192]{0}', space=vmem, size = 0x2000, scoped, tag = 'input window, operand 0, single buffered']
    #allocation3 [shape = 's32[1]{0}', space=sflag, size = 0x4, scoped, tag = 'scoped memory for tpu_custom_call.1']
    #allocation4 [shape = 's32[1]{0}', space=sflag, size = 0x4, scoped, tag = 'scoped memory for tpu_custom_call.1']
    #allocation5 [shape = 'u8[8192]{0}', space=vmem, size = 0x2000, scoped, tag = 'output window, operand 0, single buffered']
    %8 = vsyncpa [#allocation3], 0
    %9 = vsyncpa [#allocation4], 0
    // Predicated region
    $region2: #{tpu_custom_call.1} parent=1 // pred_check
      _
    $region3: #{tpu_custom_call.1} parent=1 // pred_check_branch
      %11 = sbr.rel (0) target = $region5
    $region4: #{tpu_custom_call.1} parent=1 // pred_region
      %s13 = ssub.s32 256, 256
      %14 = vsyncadd [#allocation3], %s13
      %s15 = sshll.u32 [#allocation2], 4
      %s16 = int_to_ptr.vmem [resolvable:$true] %s15
      %21 = dma.hbm_to_vmem [thread:$0]  %s0, 256, %s16, [#allocation3], 128, 128, 8
    $region5: #{tpu_custom_call.1} parent=1 // pred_fallthru
      _
    // Predicated region
    $region6: #{tpu_custom_call.1} parent=1 // pred_check
      _
    $region7: #{tpu_custom_call.1} parent=1 // pred_check_branch
      %23 = sbr.rel (0) target = $region9
    $region8: #{tpu_custom_call.1} parent=1 // pred_region
      %24 = dma.done [#allocation3], 256
    $region9: #{tpu_custom_call.1} parent=1 // pred_fallthru
      _
    %v25 = vld [vmem:[#allocation2] sm:$0xff]
    %v26 = vld [vmem:[#allocation2 + $0x8] sm:$0xff]
    %v27 = vand.u32 2147483647, %v25
    %v28 = vand.u32 2147483647, %v26
    %v29 = vsub.f32 0.0, %v27
    %v30 = vsub.f32 0.0, %v28
    %v31 = vmul.f32 %v29, 1.442695
    %v32 = vpow.pop %v31
    %v33 = vmul.f32 %v30, 1.442695
    %v34 = vpow.pop %v33
    %vm35 = vcmp.ge.f32.partialorder %v25, 0.0
    %vm36 = vcmp.ge.f32.partialorder %v26, 0.0
    %v37 = vsel %vm35, 1.0, %v32
    %v38 = vsel %vm36, 1.0, %v34
    %v39 = vadd.f32 %v32, 1.0
    %v40 = vadd.f32 %v34, 1.0
    %v41 = vrcp.pop %v39
    %v42 = vmul.f32 %v37, %v41
    %v43 = vrcp.pop %v40
    %v44 = vmul.f32 %v38, %v43
    %vm45 = vcmask 261120
    %46 = vst.msk [vmem:[#allocation5] sm:$0xff] %vm45, %v42
    %47 = vst.msk [vmem:[#allocation5 + $0x8] sm:$0xff] %vm45, %v44
    %v48 = vlog2.pop %v39
    %v49 = vmul.f32 %v48, 0.6931472
    %v50 = vlog2.pop %v40
    %v51 = vmul.f32 %v50, 0.6931472
    %v52 = vmul.f32 %v49, 2.0
    %v53 = vmul.f32 %v51, 2.0
    %v54 = vsub.f32 %v29, %v52
    %v55 = vsub.f32 %v30, %v53
    %v56 = vsel %vm45, %v54, 0.0
    %57 = vadd.xlane.f32.xlu0 %v56
    %v58 = vpop.xlane.xlu0 %57
    %v59 = vsel %vm45, %v55, 0.0
    %60 = vadd.xlane.f32.xlu0 %v59
    %v61 = vpop.xlane.xlu0 %60
    %p62 = scmp.eq.s32.totalorder 0, 0
    // Predicated region
    $region10: #{tpu_custom_call.1} parent=1 // pred_check
      %p63 = pneg %p62
    $region11: #{tpu_custom_call.1} parent=1 // pred_check_branch
      %65 = sbr.rel (%p63) target = $region13
    $region12: #{tpu_custom_call.1} parent=1 // pred_region
      %vm66 = vcmask 7168
      %67 = vst.msk [vmem:[%s2] sm:$0xff] %vm66, 0.0
      %68 = vst.msk [vmem:[%s2 + $0x8] sm:$0xff] %vm66, 0.0
    $region13: #{tpu_custom_call.1} parent=1 // pred_fallthru
      _
    %v69 = vld [vmem:[%s2] sm:$0xff]
    %v70 = vld [vmem:[%s2 + $0x8] sm:$0xff]
    %v71 = vadd.f32 %v69, %v58
    %v72 = vadd.f32 %v70, %v61
    %vm73 = vcmask 7168
    %74 = vst.msk [vmem:[%s2] sm:$0xff] %vm73, %v71
    %75 = vst.msk [vmem:[%s2 + $0x8] sm:$0xff] %vm73, %v72
    // Predicated region
    $region14: #{tpu_custom_call.1} parent=1 // pred_check
      _
    $region15: #{tpu_custom_call.1} parent=1 // pred_check_branch
      %77 = sbr.rel (0) target = $region17
    $region16: #{tpu_custom_call.1} parent=1 // pred_region
      %s79 = ssub.s32 256, 256
      %80 = vsyncadd [#allocation4], %s79
      %s81 = sshll.u32 [#allocation5], 4
      %s82 = int_to_ptr.vmem [resolvable:$true] %s81
      %87 = dma.vmem_to_hbm [thread:$0]  %s82, 256, %s1, [#allocation4], 128, 128, 8
    $region17: #{tpu_custom_call.1} parent=1 // pred_fallthru
      _
    // Predicated region
    $region18: #{tpu_custom_call.1} parent=1 // pred_check
      _
    $region19: #{tpu_custom_call.1} parent=1 // pred_check_branch
      %89 = sbr.rel (0) target = $region21
    $region20: #{tpu_custom_call.1} parent=1 // pred_region
      _
    $region21: #{tpu_custom_call.1} parent=1 // pred_fallthru
      _
    // Predicated region
    $region22: #{tpu_custom_call.1} parent=1 // pred_check
      _
    $region23: #{tpu_custom_call.1} parent=1 // pred_check_branch
      %91 = sbr.rel (0) target = $region25
    $region24: #{tpu_custom_call.1} parent=1 // pred_region
      %92 = dma.done [#allocation4], 256
    $region25: #{tpu_custom_call.1} parent=1 // pred_fallthru
      _
    // Predicated region
    $region26: #{tpu_custom_call.1} parent=1 // pred_check
      _
    $region27: #{tpu_custom_call.1} parent=1 // pred_check_branch
      %94 = sbr.rel (0) target = $region29
    $region28: #{tpu_custom_call.1} parent=1 // pred_region
      _
    $region29: #{tpu_custom_call.1} parent=1 // pred_fallthru
      _
    %95 = vsyncpa [#allocation3], 1
    %96 = vsyncpa [#allocation4], 1

</llo_original>
